<compile_context>
chip_gen: v6e
topology: v6e:2x2x1
jax: 0.10.0
libtpu: 0.0.40
codegen_flags: <defaults>
</compile_context>

<pallas_src>
import jax
import jax.numpy as jnp
from jax.experimental import pallas as pl
from jax.experimental.pallas import tpu as pltpu


def _linear_kernel(x_ref, w_ref, b_ref, o_ref):
    # x_ref: (tn, kp)  node-feature tile in its ORIGINAL dtype; cast here in
    #        VMEM so no f32 copy of x is ever materialized in HBM.
    # w_ref: (kp, mp)  weight (block-diagonal packed when pack > 1), f32,
    #        grid-invariant.
    # b_ref: (1, mp)   bias (lane-packed), f32, grid-invariant.
    # o_ref: (tn, mp)  output tile; mp is a multiple of 128 whenever packing
    #        is active, so every store is a full-lane vst.
    x = x_ref[...].astype(jnp.float32)
    acc = jnp.dot(x, w_ref[...], preferred_element_type=jnp.float32)
    o_ref[...] = (acc + b_ref[...]).astype(o_ref.dtype)


def _round_up(x, m):
    return ((x + m - 1) // m) * m


def linear_node_encoder(x, weight, bias, *, tile_rows=4096,
                        out_dtype=jnp.float32):
    """LinearNodeEncoder forward: float32(x) @ weight.T + bias.

    x:      [N, dim_in]       any dtype (int features are cast in-kernel)
    weight: [emb_dim, dim_in] torch nn.Linear layout
    bias:   [emb_dim]
    returns [N, emb_dim] out_dtype (float32 by default, matching PyTorch)

    tile_rows is measured in *packed* rows (each packed row holds `pack`
    original node rows when emb_dim < 128).
    """
    n, dim_in = x.shape
    emb_dim = weight.shape[0]

    weight = weight.astype(jnp.float32)
    bias = bias.astype(jnp.float32)
    w_t = weight.T  # [dim_in, emb_dim]

    # --- lane-dense packing factor ---------------------------------------
    # Base pack makes the output side a full 128-lane row; then, if possible,
    # grow it (x2, x4, ...) so the K side (pack*dim_in) is 128-dense too.
    pack = 1
    if emb_dim < 128 and 128 % emb_dim == 0:
        pack = 128 // emb_dim
        for mult in (1, 2, 4, 8):
            p = pack * mult
            if p * dim_in > 1024:
                break
            if (p * dim_in) % 128 == 0:
                pack = p
                break

    if pack > 1:
        n_pad = _round_up(n, pack)
        x_p = x
        if n_pad != n:
            # <= pack-1 zero rows: negligible HBM traffic, keeps lane-dense path.
            x_p = jnp.concatenate(
                [x, jnp.zeros((n_pad - n, dim_in), dtype=x.dtype)], axis=0)
        # Contiguous row-major reshape -> metadata only, no extra HBM pass.
        x_p = x_p.reshape(n_pad // pack, pack * dim_in)
        # Block-diagonal weight: block (p, q) is w_t when p == q else 0.
        eye = jnp.eye(pack, dtype=jnp.float32)
        w_p = jnp.einsum("pq,km->pkqm", eye, w_t).reshape(
            pack * dim_in, pack * emb_dim)
        b_p = jnp.tile(bias, pack).reshape(1, pack * emb_dim)
    else:
        n_pad = n
        x_p = x
        w_p = w_t
        b_p = bias.reshape(1, emb_dim)

    np_, kp = x_p.shape
    mp = pack * emb_dim

    # --- tile / grid selection (balanced for 2-TC chips) -------------------
    if np_ <= tile_rows:
        tn = np_                                    # full dim -> always legal
        grid = (1,)
    else:
        steps = pl.cdiv(np_, tile_rows)
        if steps % 2:                               # even split: both TCs busy
            steps += 1
        tn = _round_up(pl.cdiv(np_, steps), 8)      # multiple of 8 sublanes
        grid = (pl.cdiv(np_, tn),)

    # --- cost estimate (helps XLA schedule around this mem-bound call) -----
    x_bytes = x_p.size * x_p.dtype.itemsize
    out_bytes = np_ * mp * jnp.dtype(out_dtype).itemsize
    w_bytes = (w_p.size + b_p.size) * 4
    cost = pl.CostEstimate(flops=2 * np_ * kp * mp,
                           transcendentals=0,
                           bytes_accessed=x_bytes + out_bytes + w_bytes)

    out = pl.pallas_call(
        _linear_kernel,
        out_shape=jax.ShapeDtypeStruct((np_, mp), out_dtype),
        grid=grid,
        in_specs=[
            pl.BlockSpec((tn, kp), lambda i: (i, 0)),   # streamed node tiles
            pl.BlockSpec((kp, mp), lambda i: (0, 0)),   # grid-invariant weight
            pl.BlockSpec((1, mp), lambda i: (0, 0)),    # grid-invariant bias
        ],
        out_specs=pl.BlockSpec((tn, mp), lambda i: (i, 0)),
        compiler_params=pltpu.CompilerParams(
            dimension_semantics=("parallel",),
            vmem_limit_bytes=48 << 20),
        cost_estimate=cost,
    )(x_p, w_p, b_p)

    # Unpack back to [N, emb_dim] (contiguous reshape) and drop the pad rows.
    out = out.reshape(n_pad, emb_dim)
    if n_pad != n:
        out = out[:n]
    return out


if __name__ == "__main__":
    # Synthetic deterministic params / inputs (cfg.share.dim_in = 32, emb_dim = 64).
    # num_nodes deliberately NOT a multiple of pack (=4) to exercise the
    # zero-pad + slice-back path.
    dim_in, emb_dim, num_nodes = 32, 64, 250

    key = jax.random.PRNGKey(0)
    kx, kw, kb = jax.random.split(key, 3)

    # batch.x arrives as non-float (e.g. int) in many GRIT datasets; exercise
    # the in-kernel cast.
    x_int = jax.random.randint(kx, (num_nodes, dim_in), minval=-3, maxval=4,
                               dtype=jnp.int32)

    # torch.nn.Linear init shapes: weight [emb_dim, dim_in], bias [emb_dim]
    bound = 1.0 / (dim_in ** 0.5)
    weight = jax.random.uniform(kw, (emb_dim, dim_in), minval=-bound,
                                maxval=bound, dtype=jnp.float32)
    bias = jax.random.uniform(kb, (emb_dim,), minval=-bound, maxval=bound,
                              dtype=jnp.float32)

    out = linear_node_encoder(x_int, weight, bias)
    out = jax.block_until_ready(out)

    # Reference check in plain JAX.
    ref = x_int.astype(jnp.float32) @ weight.T + bias
    assert out.shape == (num_nodes, emb_dim)
    assert out.dtype == jnp.float32
    assert jnp.allclose(out, ref, atol=1e-5, rtol=1e-5), "mismatch vs reference"

    print("KERNEL_OK")
</pallas_src>

<mosaic_0001>
module attributes {stable_mosaic.version = 11 : i64} {
  func.func @_linear_kernel(%arg0: i32, %arg1: memref<63x128xi32, #tpu.memory_space<vmem>>, %arg2: memref<128x256xf32, #tpu.memory_space<vmem>>, %arg3: memref<1x256xf32, #tpu.memory_space<vmem>>, %arg4: memref<63x256xf32, #tpu.memory_space<vmem>>) attributes {dimension_semantics = [#tpu.dimension_semantics<parallel>], iteration_bounds = array<i64: 1>, scalar_prefetch = 0 : i64, scratch_operands = 0 : i64, tpu.core_type = #tpu.core_type<tc>, window_params = [{transform_indices = @transform_0, window_bounds = array<i64: 63, 128>}, {pipeline_mode = #tpu.pipeline_mode<synchronous>, transform_indices = @transform_1, window_bounds = array<i64: 128, 256>}, {pipeline_mode = #tpu.pipeline_mode<synchronous>, transform_indices = @transform_2, window_bounds = array<i64: 1, 256>}, {transform_indices = @transform_3, window_bounds = array<i64: 63, 256>}]} {
    %c0 = arith.constant 0 : index
    %c0_0 = arith.constant 0 : index
    %0 = vector.load %arg1[%c0, %c0_0] : memref<63x128xi32, #tpu.memory_space<vmem>>, vector<63x128xi32>
    %1 = arith.sitofp %0 : vector<63x128xi32> to vector<63x128xf32>
    %c0_1 = arith.constant 0 : index
    %c0_2 = arith.constant 0 : index
    %2 = vector.load %arg2[%c0_1, %c0_2] : memref<128x256xf32, #tpu.memory_space<vmem>>, vector<128x256xf32>
    %cst = arith.constant dense<0.000000e+00> : vector<63x256xf32>
    %3 = tpu.matmul %1, %2, %cst {dimension_numbers = #tpu.dot_dimension_numbers<[1], [0], [0], [1], [0, 0, 1, 1], [], []>} : vector<63x128xf32>, vector<128x256xf32>, vector<63x256xf32> -> vector<63x256xf32>
    %c0_3 = arith.constant 0 : index
    %c0_4 = arith.constant 0 : index
    %4 = vector.load %arg3[%c0_3, %c0_4] : memref<1x256xf32, #tpu.memory_space<vmem>>, vector<1x256xf32>
    %5 = vector.broadcast %4 : vector<1x256xf32> to vector<63x256xf32>
    %6 = arith.addf %3, %5 : vector<63x256xf32>
    %c0_5 = arith.constant 0 : index
    %c0_6 = arith.constant 0 : index
    %7 = vector.load %arg4[%c0_5, %c0_6] : memref<63x256xf32, #tpu.memory_space<vmem>>, vector<63x256xf32>
    tpu.vector_store %arg4[%c0_5, %c0_6], %6 {strides = array<i32>} : memref<63x256xf32, #tpu.memory_space<vmem>>, vector<63x256xf32>,
    return
  }
  func.func @transform_0(%arg0: i32) -> (i32, i32) {
    %c0_i32 = arith.constant 0 : i32
    %c0_i32_0 = arith.constant 0 : i32
    return %arg0, %c0_i32 : i32, i32
  }
  func.func @transform_1(%arg0: i32) -> (i32, i32) {
    %c0_i32 = arith.constant 0 : i32
    %c0_i32_0 = arith.constant 0 : i32
    %c0_i32_1 = arith.constant 0 : i32
    return %c0_i32, %c0_i32_0 : i32, i32
  }
  func.func @transform_2(%arg0: i32) -> (i32, i32) {
    %c0_i32 = arith.constant 0 : i32
    %c0_i32_0 = arith.constant 0 : i32
    %c0_i32_1 = arith.constant 0 : i32
    return %c0_i32, %c0_i32_0 : i32, i32
  }
  func.func @transform_3(%arg0: i32) -> (i32, i32) {
    %c0_i32 = arith.constant 0 : i32
    %c0_i32_0 = arith.constant 0 : i32
    return %arg0, %c0_i32 : i32, i32
  }
}

</mosaic_0001>

<llo_original>
// kernel: tpu_custom_call.1
$region0: #{tpu_custom_call.1}
  #allocation0 [shape = 'u32[]', space=smem, size = 0x4, offset = 0x4, fixed_abs, tag = 'smem constant byte address 0x4 - core index']
  #allocation1 [shape = 'u32[144,128]{1,0:T(1,128)}', space=vmem, size = 0x12000, scoped, tag = 'internal scratch']
  %s0 = inlined_call_operand.hbm [shape: s32[63,128], index: 0, kind: input, shape index: {}]
  %s1 = inlined_call_operand.hbm [shape: f32[128,256], index: 1, kind: input, shape index: {}]
  %s2 = inlined_call_operand.vmem [shape: f32[1,256], index: 2, kind: input, shape index: {}]
  %s3 = inlined_call_operand.hbm [shape: f32[63,256], index: 3, kind: output, shape index: {}]
  %s4 = sld [smem:[#allocation0]]
  $region30: #{tpu_custom_call.1} parent=0
    _
  %s6 = ssub.s32 1, %s4
  %s7 = scalar_select 0, %s6, %s4
  $region1: #{tpu_custom_call.1} parent=0
    #allocation2 [shape = 'u8[32768]{0}', space=vmem, size = 0x8000, scoped, tag = 'input window, operand 0, single buffered']
    #allocation3 [shape = 's32[1]{0}', space=sflag, size = 0x4, scoped, tag = 'scoped memory for tpu_custom_call.1']
    #allocation4 [shape = 's32[1]{0}', space=sflag, size = 0x4, scoped, tag = 'scoped memory for tpu_custom_call.1']
    #allocation5 [shape = 'u8[131072]{0}', space=vmem, size = 0x20000, scoped, tag = 'input window, operand 1, single buffered']
    #allocation6 [shape = 's32[1]{0}', space=sflag, size = 0x4, scoped, tag = 'scoped memory for tpu_custom_call.1']
    #allocation7 [shape = 'u8[65536]{0}', space=vmem, size = 0x10000, scoped, tag = 'output window, operand 0, single buffered']
    %8 = vsyncpa [#allocation3], 0
    %9 = vsyncpa [#allocation6], 0
    %10 = vsyncpa [#allocation4], 0
    // Predicated region
    $region2: #{tpu_custom_call.1} parent=1 // pred_check
      _
    $region3: #{tpu_custom_call.1} parent=1 // pred_check_branch
      %12 = sbr.rel (0) target = $region5
    $region4: #{tpu_custom_call.1} parent=1 // pred_region
      %s14 = ssub.s32 1024, 1024
      %15 = vsyncadd [#allocation3], %s14
      %s16 = sshll.u32 [#allocation2], 4
      %s17 = int_to_ptr.vmem [resolvable:$true] %s16
      %22 = dma.hbm_to_vmem [thread:$0]  %s0, 1024, %s17, [#allocation3], 128, 128, 8
    $region5: #{tpu_custom_call.1} parent=1 // pred_fallthru
      _
    // Predicated region
    $region6: #{tpu_custom_call.1} parent=1 // pred_check
      _
    $region7: #{tpu_custom_call.1} parent=1 // pred_check_branch
      %24 = sbr.rel (0) target = $region9
    $region8: #{tpu_custom_call.1} parent=1 // pred_region
      %s26 = ssub.s32 4096, 4096
      %27 = vsyncadd [#allocation6], %s26
      %s28 = sshll.u32 [#allocation5], 4
      %s29 = int_to_ptr.vmem [resolvable:$true] %s28
      %34 = dma.hbm_to_vmem [thread:$0]  %s1, 4096, %s29, [#allocation6], 256, 256, 16
    $region9: #{tpu_custom_call.1} parent=1 // pred_fallthru
      _
    // Predicated region
    $region10: #{tpu_custom_call.1} parent=1 // pred_check
      _
    $region11: #{tpu_custom_call.1} parent=1 // pred_check_branch
      %36 = sbr.rel (0) target = $region13
    $region12: #{tpu_custom_call.1} parent=1 // pred_region
      _
    $region13: #{tpu_custom_call.1} parent=1 // pred_fallthru
      _
    // Predicated region
    $region14: #{tpu_custom_call.1} parent=1 // pred_check
      _
    $region15: #{tpu_custom_call.1} parent=1 // pred_check_branch
      %38 = sbr.rel (0) target = $region17
    $region16: #{tpu_custom_call.1} parent=1 // pred_region
      %39 = dma.done [#allocation3], 1024
    $region17: #{tpu_custom_call.1} parent=1 // pred_fallthru
      _
    // Predicated region
    $region18: #{tpu_custom_call.1} parent=1 // pred_check
      _
    $region19: #{tpu_custom_call.1} parent=1 // pred_check_branch
      %41 = sbr.rel (0) target = $region21
    $region20: #{tpu_custom_call.1} parent=1 // pred_region
      %42 = dma.done [#allocation6], 4096
    $region21: #{tpu_custom_call.1} parent=1 // pred_fallthru
      _
    %v43 = vld [vmem:[#allocation2] sm:$0xff]
    %v44 = vld [vmem:[#allocation2 + $0x8] sm:$0xff]
    %v45 = vld [vmem:[#allocation2 + $0x10] sm:$0xff]
    %v46 = vld [vmem:[#allocation2 + $0x18] sm:$0xff]
    %v47 = vld [vmem:[#allocation2 + $0x20] sm:$0xff]
    %v48 = vld [vmem:[#allocation2 + $0x28] sm:$0xff]
    %v49 = vld [vmem:[#allocation2 + $0x30] sm:$0xff]
    %v50 = vld [vmem:[#allocation2 + $0x38] sm:$0x7f]
    %v51 = vcvt.s32.f32 %v43
    %v52 = vcvt.s32.f32 %v44
    %v53 = vcvt.s32.f32 %v45
    %v54 = vcvt.s32.f32 %v46
    %v55 = vcvt.s32.f32 %v47
    %v56 = vcvt.s32.f32 %v48
    %v57 = vcvt.s32.f32 %v49
    %v58 = vcvt.s32.f32 %v50
    %v59 = vld [vmem:[#allocation5] sm:$0xff]
    %v60 = vld [vmem:[#allocation5 + $0x8] sm:$0xff]
    %v61 = vld [vmem:[#allocation5 + $0x10] sm:$0xff]
    %v62 = vld [vmem:[#allocation5 + $0x18] sm:$0xff]
    %v63 = vld [vmem:[#allocation5 + $0x20] sm:$0xff]
    %v64 = vld [vmem:[#allocation5 + $0x28] sm:$0xff]
    %v65 = vld [vmem:[#allocation5 + $0x30] sm:$0xff]
    %v66 = vld [vmem:[#allocation5 + $0x38] sm:$0xff]
    %v67 = vld [vmem:[#allocation5 + $0x40] sm:$0xff]
    %v68 = vld [vmem:[#allocation5 + $0x48] sm:$0xff]
    %v69 = vld [vmem:[#allocation5 + $0x50] sm:$0xff]
    %v70 = vld [vmem:[#allocation5 + $0x58] sm:$0xff]
    %v71 = vld [vmem:[#allocation5 + $0x60] sm:$0xff]
    %v72 = vld [vmem:[#allocation5 + $0x68] sm:$0xff]
    %v73 = vld [vmem:[#allocation5 + $0x70] sm:$0xff]
    %v74 = vld [vmem:[#allocation5 + $0x78] sm:$0xff]
    %v75 = vld [vmem:[#allocation5 + $0x80] sm:$0xff]
    %v76 = vld [vmem:[#allocation5 + $0x88] sm:$0xff]
    %v77 = vld [vmem:[#allocation5 + $0x90] sm:$0xff]
    %v78 = vld [vmem:[#allocation5 + $0x98] sm:$0xff]
    %v79 = vld [vmem:[#allocation5 + $0xa0] sm:$0xff]
    %v80 = vld [vmem:[#allocation5 + $0xa8] sm:$0xff]
    %v81 = vld [vmem:[#allocation5 + $0xb0] sm:$0xff]
    %v82 = vld [vmem:[#allocation5 + $0xb8] sm:$0xff]
    %v83 = vld [vmem:[#allocation5 + $0xc0] sm:$0xff]
    %v84 = vld [vmem:[#allocation5 + $0xc8] sm:$0xff]
    %v85 = vld [vmem:[#allocation5 + $0xd0] sm:$0xff]
    %v86 = vld [vmem:[#allocation5 + $0xd8] sm:$0xff]
    %v87 = vld [vmem:[#allocation5 + $0xe0] sm:$0xff]
    %v88 = vld [vmem:[#allocation5 + $0xe8] sm:$0xff]
    %v89 = vld [vmem:[#allocation5 + $0xf0] sm:$0xff]
    %v90 = vld [vmem:[#allocation5 + $0xf8] sm:$0xff]
    %v91 = vld [vmem:[%s2] sm:$0x3]
    %v93 = vlaneseq
    %v94 = vshrl.u32 %v93, 7
    %v95 = vsub.s32 0, %v94
    %v96 = vrot.slane %v91, %v95
    %v97 = vlaneseq
    %v98 = vshrl.u32 %v97, 7
    %v99 = vsub.s32 1, %v98
    %v100 = vrot.slane %v91, %v99
    %103 = vmatprep.subr.mxu0 %v90
    %104 = vmatpush1.msra.mxu0 %v89
    %105 = vmatprep.subr.mxu0 %v88
    %106 = vmatpush1.msra.mxu0 %v87
    %107 = vmatprep.subr.mxu0 %v86
    %108 = vmatpush1.msra.mxu0 %v85
    %109 = vmatprep.subr.mxu0 %v84
    %110 = vmatpush1.msra.mxu0 %v83
    %111 = vmatprep.subr.mxu0 %v82
    %112 = vmatpush1.msra.mxu0 %v81
    %113 = vmatprep.subr.mxu0 %v80
    %114 = vmatpush1.msra.mxu0 %v79
    %115 = vmatprep.subr.mxu0 %v78
    %116 = vmatpush1.msra.mxu0 %v77
    %117 = vmatprep.subr.mxu0 %v76
    %118 = vmatpush1.msra.mxu0 %v75
    %119 = vmatprep.subr.mxu0 %v74
    %120 = vmatpush1.msra.mxu0 %v73
    %121 = vmatprep.subr.mxu0 %v72
    %122 = vmatpush1.msra.mxu0 %v71
    %123 = vmatprep.subr.mxu0 %v70
    %124 = vmatpush1.msra.mxu0 %v69
    %125 = vmatprep.subr.mxu0 %v68
    %126 = vmatpush1.msra.mxu0 %v67
    %127 = vmatprep.subr.mxu0 %v66
    %128 = vmatpush1.msra.mxu0 %v65
    %129 = vmatprep.subr.mxu0 %v64
    %130 = vmatpush1.msra.mxu0 %v63
    %131 = vmatprep.subr.mxu0 %v62
    %132 = vmatpush1.msra.mxu0 %v61
    %133 = vmatprep.subr.mxu0 %v60
    %134 = vmatpush1.msra.mxu0 %v59
    %135 = vmatprep.subr.mxu0 0.0
    %136 = vmatpush2.msra.mxu0 0.0
    %137 = vmatprep.subr.mxu0 0.0
    %138 = vmatpush2.msra.mxu0 0.0
    %139 = vmatprep.subr.mxu0 0.0
    %140 = vmatpush2.msra.mxu0 0.0
    %141 = vmatprep.subr.mxu0 0.0
    %142 = vmatpush2.msra.mxu0 0.0
    %143 = vmatprep.subr.mxu0 0.0
    %144 = vmatpush2.msra.mxu0 0.0
    %145 = vmatprep.subr.mxu0 0.0
    %146 = vmatpush2.msra.mxu0 0.0
    %147 = vmatprep.subr.mxu0 0.0
    %148 = vmatpush2.msra.mxu0 0.0
    %149 = vmatprep.subr.mxu0 0.0
    %150 = vmatpush2.msra.mxu0 0.0
    %151 = vmatprep.subr.mxu0 0.0
    %152 = vmatpush2.msra.mxu0 0.0
    %153 = vmatprep.subr.mxu0 0.0
    %154 = vmatpush2.msra.mxu0 0.0
    %155 = vmatprep.subr.mxu0 0.0
    %156 = vmatpush2.msra.mxu0 0.0
    %157 = vmatprep.subr.mxu0 0.0
    %158 = vmatpush2.msra.mxu0 0.0
    %159 = vmatprep.subr.mxu0 0.0
    %160 = vmatpush2.msra.mxu0 0.0
    %161 = vmatprep.subr.mxu0 0.0
    %162 = vmatpush2.msra.mxu0 0.0
    %163 = vmatprep.subr.mxu0 0.0
    %164 = vmatpush2.msra.mxu0 0.0
    %165 = vmatprep.subr.mxu0 0.0
    %166 = vmatpush2.msra.mxu0 0.0
    %167 = vmatprep.mubr.f32.mxu0 0.0
    %168 = vmatmul.mubr.f32.gmra.mxu0 %v51
    %v169 = vpop.f32.mrf.mxu0
    %v170 = vadd.f32 %v96, %v169
    %v171 = vpop.f32.mrf.mxu0
    %v172 = vadd.f32 %v100, %v171
    %173 = vmatprep.mubr.f32.mxu0 0.0
    %174 = vmatmul.mubr.f32.gmra.mxu0 %v52
    %v175 = vpop.f32.mrf.mxu0
    %v176 = vadd.f32 %v96, %v175
    %v177 = vpop.f32.mrf.mxu0
    %v178 = vadd.f32 %v100, %v177
    %179 = vmatprep.mubr.f32.mxu0 0.0
    %180 = vmatmul.mubr.f32.gmra.mxu0 %v53
    %v181 = vpop.f32.mrf.mxu0
    %v182 = vadd.f32 %v96, %v181
    %v183 = vpop.f32.mrf.mxu0
    %v184 = vadd.f32 %v100, %v183
    %185 = vmatprep.mubr.f32.mxu0 0.0
    %186 = vmatmul.mubr.f32.gmra.mxu0 %v54
    %v187 = vpop.f32.mrf.mxu0
    %v188 = vadd.f32 %v96, %v187
    %v189 = vpop.f32.mrf.mxu0
    %v190 = vadd.f32 %v100, %v189
    %191 = vmatprep.mubr.f32.mxu0 0.0
    %192 = vmatmul.mubr.f32.gmra.mxu0 %v55
    %v193 = vpop.f32.mrf.mxu0
    %v194 = vadd.f32 %v96, %v193
    %v195 = vpop.f32.mrf.mxu0
    %v196 = vadd.f32 %v100, %v195
    %197 = vmatprep.mubr.f32.mxu0 0.0
    %198 = vmatmul.mubr.f32.gmra.mxu0 %v56
    %v199 = vpop.f32.mrf.mxu0
    %v200 = vadd.f32 %v96, %v199
    %v201 = vpop.f32.mrf.mxu0
    %v202 = vadd.f32 %v100, %v201
    %203 = vmatprep.mubr.f32.mxu0 0.0
    %204 = vmatmul.mubr.f32.gmra.mxu0 %v57
    %v205 = vpop.f32.mrf.mxu0
    %v206 = vadd.f32 %v96, %v205
    %v207 = vpop.f32.mrf.mxu0
    %v208 = vadd.f32 %v100, %v207
    %209 = vmatprep.mubr.f32.mxu0 0.0
    %210 = vmatmul.mubr.f32.gmra.mxu0 %v58
    %v211 = vpop.f32.mrf.mxu0
    %v212 = vadd.f32 %v96, %v211
    %v213 = vpop.f32.mrf.mxu0
    %v214 = vadd.f32 %v100, %v213
    %215 = vdwg.mxu0
    %216 = vst [vmem:[#allocation7] sm:$0xff] %v170
    %217 = vst [vmem:[#allocation7 + $0x8] sm:$0xff] %v172
    %218 = vst [vmem:[#allocation7 + $0x10] sm:$0xff] %v176
    %219 = vst [vmem:[#allocation7 + $0x18] sm:$0xff] %v178
    %220 = vst [vmem:[#allocation7 + $0x20] sm:$0xff] %v182
    %221 = vst [vmem:[#allocation7 + $0x28] sm:$0xff] %v184
    %222 = vst [vmem:[#allocation7 + $0x30] sm:$0xff] %v188
    %223 = vst [vmem:[#allocation7 + $0x38] sm:$0xff] %v190
    %224 = vst [vmem:[#allocation7 + $0x40] sm:$0xff] %v194
    %225 = vst [vmem:[#allocation7 + $0x48] sm:$0xff] %v196
    %226 = vst [vmem:[#allocation7 + $0x50] sm:$0xff] %v200
    %227 = vst [vmem:[#allocation7 + $0x58] sm:$0xff] %v202
    %228 = vst [vmem:[#allocation7 + $0x60] sm:$0xff] %v206
    %229 = vst [vmem:[#allocation7 + $0x68] sm:$0xff] %v208
    %230 = vst [vmem:[#allocation7 + $0x70] sm:$0x7f] %v212
    %231 = vst [vmem:[#allocation7 + $0x78] sm:$0x7f] %v214
    // Predicated region
    $region22: #{tpu_custom_call.1} parent=1 // pred_check
      _
    $region23: #{tpu_custom_call.1} parent=1 // pred_check_branch
      %233 = sbr.rel (0) target = $region25
    $region24: #{tpu_custom_call.1} parent=1 // pred_region
      %s235 = ssub.s32 2048, 2048
      %236 = vsyncadd [#allocation4], %s235
      %s237 = sshll.u32 [#allocation7], 4
      %s238 = int_to_ptr.vmem [resolvable:$true] %s237
      %243 = dma.vmem_to_hbm [thread:$0]  %s238, 2048, %s3, [#allocation4], 256, 256, 16
    $region25: #{tpu_custom_call.1} parent=1 // pred_fallthru
      _
    // Predicated region
    $region26: #{tpu_custom_call.1} parent=1 // pred_check
      _
    $region27: #{tpu_custom_call.1} parent=1 // pred_check_branch
      %245 = sbr.rel (0) target = $region29
    $region28: #{tpu_custom_call.1} parent=1 // pred_region
      %246 = dma.done [#allocation4], 2048
    $region29: #{tpu_custom_call.1} parent=1 // pred_fallthru
      _
    %247 = vsyncpa [#allocation3], 1
    %248 = vsyncpa [#allocation6], 1
    %249 = vsyncpa [#allocation4], 1

</llo_original>
